<compile_context>
chip_gen: v7x
topology: tpu7x:2x2x1
jax: 0.10.0
libtpu: 0.0.40
codegen_flags: <defaults>
</compile_context>

<pallas_src>
import numpy as np
import jax
import jax.numpy as jnp
from jax.experimental import pallas as pl
from jax.experimental.pallas import tpu as pltpu


_VMEM_LIMIT = 48 * 1024 * 1024  # < v7x's 64 MiB physical; actual use is far below

_STAGES = [(4, 64), (8, 128), (16, 256), (32, 512)]   # (stride, channels)
_STAGE_PAD = [128, 128, 256, 512]                      # lane-dense channel counts


def _pick_tile(n, candidates, min_steps=1, cap=None):
    """Largest candidate dividing n (and <= cap) leaving >= min_steps grid steps.
    Falls back to the largest divisor <= cap, then to n itself."""
    fallback = None
    for c in candidates:
        if c > n or n % c != 0:
            continue
        if cap is not None and c > cap:
            continue
        if n // c >= min_steps:
            return c
        if fallback is None:
            fallback = c
    return fallback if fallback is not None else n


# ----------------------------------------------------------------------------
# Kernel A: stand-in feature projection (patchified strided conv) — row tiled
# ----------------------------------------------------------------------------
def _matmul_bias_kernel(x_ref, w_ref, b_ref, o_ref):
    acc = jnp.dot(x_ref[...].astype(jnp.bfloat16), w_ref[...],
                  preferred_element_type=jnp.float32)
    o_ref[...] = (acc + b_ref[...]).astype(o_ref.dtype)


def matmul_bias(x, w_bf16, b_f32):
    """x: [R, K] f32, w: [K, C] bf16, b: [C] f32 -> [R, C] bf16, row tiled."""
    R, K = x.shape
    C = w_bf16.shape[1]
    cap = max(8, (8 * 1024 * 1024) // (K * 4))          # x block <= ~8 MiB
    tile = _pick_tile(R, (1024, 512, 256, 128, 64, 32, 16, 8), min_steps=2, cap=cap)
    return pl.pallas_call(
        _matmul_bias_kernel,
        out_shape=jax.ShapeDtypeStruct((R, C), jnp.bfloat16),
        grid=(R // tile,),
        in_specs=[
            pl.BlockSpec((tile, K), lambda i: (i, 0)),
            pl.BlockSpec((K, C), lambda i: (0, 0)),
            pl.BlockSpec((1, C), lambda i: (0, 0)),
        ],
        out_specs=pl.BlockSpec((tile, C), lambda i: (i, 0)),
        compiler_params=pltpu.CompilerParams(
            dimension_semantics=("parallel",),
            vmem_limit_bytes=_VMEM_LIMIT,
        ),
    )(x, w_bf16, b_f32.reshape(1, C))


# ----------------------------------------------------------------------------
# Kernel B: separable bilinear upsample (align_corners=False)
#   W-interp: integer-ratio 2-tap lerp (VPU, f32) on the h INPUT rows -> scratch
#   H-interp: one [th, h] @ [h, W0*C] MXU matmul, single lane-dense store
# ----------------------------------------------------------------------------
def _lerp_taps(r):
    """Per-phase (a, d0, b, d1) taps for align_corners=False, integer ratio r."""
    taps = []
    for m in range(r):
        t = (m + 0.5) / r - 0.5
        if t >= 0.0:
            taps.append((1.0 - t, 0, t, 1))
        else:
            taps.append((-t, -1, 1.0 + t, 0))
    return taps


def _make_upsample_kernel(w, C, r):
    taps = _lerp_taps(r)

    def kernel(ah_ref, x_ref, o_ref, xw_ref):
        # ---- W-interp (VPU, f32) on the h input rows into VMEM scratch ----
        for k in range(w):
            need = sorted({min(max(k + d, 0), w - 1)
                           for (_, d0, _, d1) in taps for d in (d0, d1)})
            col = {j: x_ref[0, :, j * C:(j + 1) * C].astype(jnp.float32)
                   for j in need}
            for m, (a, d0, b, d1) in enumerate(taps):
                k0 = min(max(k + d0, 0), w - 1)
                k1 = min(max(k + d1, 0), w - 1)
                part = a * col[k0] + b * col[k1]
                j = k * r + m
                xw_ref[:, j * C:(j + 1) * C] = part.astype(xw_ref.dtype)
        # ---- H-interp (MXU): one lane-dense [th, W0*C] tile, single store ----
        o_ref[0] = jnp.dot(ah_ref[...].astype(jnp.bfloat16), xw_ref[...],
                           preferred_element_type=jnp.float32).astype(o_ref.dtype)

    return kernel


def upsample_level(Ah, x_lvl, *, w, C, r, H0):
    """Ah: [H0, h] f32 interp matrix, x_lvl: [N, h, w*C] bf16 -> [N, H0, W0*C].

    The output reshapes (free, row-major) to [N*H0*W0, C]."""
    N, h, wC = x_lvl.shape
    W0 = w * r
    # Keep the (double-buffered) output block around <= 4 MiB; when N == 1 also
    # force >= 2 H-row blocks so both v7x TensorCores get work.
    cap = max(8, (4 * 1024 * 1024) // (W0 * C * x_lvl.dtype.itemsize))
    if N < 2:
        cap = min(cap, max(8, H0 // 2))
    th = _pick_tile(H0, (256, 128, 64, 32, 16, 8), cap=cap)
    return pl.pallas_call(
        _make_upsample_kernel(w=w, C=C, r=r),
        out_shape=jax.ShapeDtypeStruct((N, H0, W0 * C), x_lvl.dtype),
        grid=(N, H0 // th),
        in_specs=[
            pl.BlockSpec((th, h), lambda n, j: (j, 0)),
            pl.BlockSpec((1, h, wC), lambda n, j: (n, 0, 0)),
        ],
        out_specs=pl.BlockSpec((1, th, W0 * C), lambda n, j: (n, j, 0)),
        scratch_shapes=[pltpu.VMEM((h, W0 * C), jnp.bfloat16)],
        compiler_params=pltpu.CompilerParams(
            dimension_semantics=("parallel", "parallel"),
            vmem_limit_bytes=_VMEM_LIMIT,
        ),
    )(Ah, x_lvl)


# ----------------------------------------------------------------------------
# Kernel C: fused head = concat + conv1x1(960->960) + BN(eval) + ReLU
#                        + conv1x1(960->classes), all lane-padded to 1024/128
# ----------------------------------------------------------------------------
def _head_kernel(x0_ref, x1_ref, x2_ref, x3_ref, w1_ref, scale_ref, shift_ref,
                 w2_ref, b2_ref, o_ref, cat_ref):
    c0 = x0_ref.shape[1]
    c1 = x1_ref.shape[1]
    c2 = x2_ref.shape[1]
    c3 = x3_ref.shape[1]
    # fused concat: copy the four bf16 tiles into one contiguous VMEM scratch
    cat_ref[:, 0:c0] = x0_ref[...]
    cat_ref[:, c0:c0 + c1] = x1_ref[...]
    cat_ref[:, c0 + c1:c0 + c1 + c2] = x2_ref[...]
    cat_ref[:, c0 + c1 + c2:c0 + c1 + c2 + c3] = x3_ref[...]
    # single full-depth (K = 1024) contraction on the MXU, f32 accumulation
    h = jnp.dot(cat_ref[...], w1_ref[...], preferred_element_type=jnp.float32)
    h = h * scale_ref[...] + shift_ref[...]          # folded eval-mode BN (+ bias)
    h = jnp.maximum(h, 0.0)                          # ReLU (f32, VPU)
    o_ref[...] = (jnp.dot(h.astype(jnp.bfloat16), w2_ref[...],
                          preferred_element_type=jnp.float32)
                  + b2_ref[...]).astype(o_ref.dtype)


def seg_head(x0f, x1f, x2f, x3f, w1p, scale_p, shift_p, w2p, b2p, classes):
    """Per-pixel head on flattened rows.  xNf: [R, C_n] bf16, R = N*H0*W0."""
    R = x0f.shape[0]
    C0, C1, C2, C3 = x0f.shape[1], x1f.shape[1], x2f.shape[1], x3f.shape[1]
    Kpad = C0 + C1 + C2 + C3
    Npad = w1p.shape[1]
    Cpad = w2p.shape[1]
    row_tile = _pick_tile(R, (2048, 1024, 512, 256, 128, 64, 32, 16, 8),
                          min_steps=2)
    out = pl.pallas_call(
        _head_kernel,
        out_shape=jax.ShapeDtypeStruct((R, Cpad), jnp.float32),
        grid=(R // row_tile,),
        in_specs=[
            pl.BlockSpec((row_tile, C0), lambda i: (i, 0)),
            pl.BlockSpec((row_tile, C1), lambda i: (i, 0)),
            pl.BlockSpec((row_tile, C2), lambda i: (i, 0)),
            pl.BlockSpec((row_tile, C3), lambda i: (i, 0)),
            pl.BlockSpec((Kpad, Npad), lambda i: (0, 0)),
            pl.BlockSpec((1, Npad), lambda i: (0, 0)),
            pl.BlockSpec((1, Npad), lambda i: (0, 0)),
            pl.BlockSpec((Npad, Cpad), lambda i: (0, 0)),
            pl.BlockSpec((1, Cpad), lambda i: (0, 0)),
        ],
        out_specs=pl.BlockSpec((row_tile, Cpad), lambda i: (i, 0)),
        scratch_shapes=[pltpu.VMEM((row_tile, Kpad), jnp.bfloat16)],
        compiler_params=pltpu.CompilerParams(
            dimension_semantics=("parallel",),
            vmem_limit_bytes=_VMEM_LIMIT,
        ),
    )(x0f, x1f, x2f, x3f, w1p,
      scale_p.reshape(1, Npad), shift_p.reshape(1, Npad),
      w2p, b2p.reshape(1, Cpad))
    return out[:, :classes]


# ----------------------------------------------------------------------------
# Glue: patchify, PyTorch-exact 1D bilinear interpolation matrix, params
# ----------------------------------------------------------------------------
def patchify(x, p):
    """NCHW -> [N*(H/p)*(W/p), C*p*p] (channels-last within each patch)."""
    N, C, H, W = x.shape
    xr = x.reshape(N, C, H // p, p, W // p, p)
    xr = jnp.transpose(xr, (0, 2, 4, 1, 3, 5))
    return xr.reshape(N * (H // p) * (W // p), C * p * p)


def interp_matrix_1d(out_size, in_size):
    """PyTorch F.interpolate(mode='bilinear', align_corners=False) 1D weights."""
    if in_size == out_size:
        return np.eye(out_size, dtype=np.float32)
    scale = in_size / out_size
    dst = np.arange(out_size, dtype=np.float64)
    src = np.maximum((dst + 0.5) * scale - 0.5, 0.0)
    i0 = np.minimum(np.floor(src).astype(np.int64), in_size - 1)
    i1 = np.minimum(i0 + 1, in_size - 1)
    lam = (src - i0).astype(np.float32)
    M = np.zeros((out_size, in_size), dtype=np.float32)
    M[np.arange(out_size), i0] += 1.0 - lam
    M[np.arange(out_size), i1] += lam
    return M


def make_params(key, classes, in_ch=3):
    keys = jax.random.split(key, 16)
    p = {}
    for s, (patch, cout) in enumerate(_STAGES):
        kin = in_ch * patch * patch
        p[f"proj_w{s}"] = 0.05 * jax.random.normal(keys[2 * s], (kin, cout), jnp.float32)
        p[f"proj_b{s}"] = 0.05 * jax.random.normal(keys[2 * s + 1], (cout,), jnp.float32)
    c = sum(co for _, co in _STAGES)  # 960
    p["w1"] = 0.05 * jax.random.normal(keys[8], (c, c), jnp.float32)
    p["b1"] = 0.05 * jax.random.normal(keys[9], (c,), jnp.float32)
    p["bn_gamma"] = 1.0 + 0.1 * jax.random.normal(keys[10], (c,), jnp.float32)
    p["bn_beta"] = 0.1 * jax.random.normal(keys[11], (c,), jnp.float32)
    p["bn_mean"] = 0.1 * jax.random.normal(keys[12], (c,), jnp.float32)
    p["bn_var"] = 1.0 + 0.1 * jnp.abs(jax.random.normal(keys[13], (c,), jnp.float32))
    p["w2"] = 0.05 * jax.random.normal(keys[14], (c, classes), jnp.float32)
    p["b2"] = 0.05 * jax.random.normal(keys[15], (classes,), jnp.float32)
    return p


# ----------------------------------------------------------------------------
# SegHRNet forward
# ----------------------------------------------------------------------------
def seg_hrnet_forward(x, params):
    N, Cin, H, W = x.shape
    assert H % 32 == 0 and W % 32 == 0, "HRNet needs H, W divisible by 32"
    H0, W0 = H // 4, W // 4

    # --- stand-in feature extractor (see TODO(synk) in the header) ---
    feats = []  # (bf16 flat [N*h*w, Cpad], h, w, Cpad)
    for s, (patch, cout) in enumerate(_STAGES):
        h, w = H // patch, W // patch
        wgt = params[f"proj_w{s}"]
        bias = params[f"proj_b{s}"]
        cpad = _STAGE_PAD[s]
        if cpad != cout:                      # stage 0: pad 64 -> 128 (lane-dense)
            wgt = jnp.pad(wgt, ((0, 0), (0, cpad - cout)))
            bias = jnp.pad(bias, (0, cpad - cout))
        xp = patchify(x, patch)               # [N*h*w, Cin*p*p] f32
        f = matmul_bias(xp, wgt.astype(jnp.bfloat16), bias)
        feats.append((f, h, w, cpad))

    # --- separable bilinear upsample of levels 1..3 to (H0, W0) ---
    flat = [feats[0][0]]                      # level 0 already at (H0, W0)
    for s in range(1, 4):
        f, h, w, C = feats[s]
        assert W0 % w == 0 and H0 % h == 0, "integer upsample ratio expected"
        r = W0 // w
        x_lvl = f.reshape(N, h, w * C)                        # free reshape
        Ah = jnp.asarray(interp_matrix_1d(H0, h))             # exact PyTorch weights
        up = upsample_level(Ah, x_lvl, w=w, C=C, r=r, H0=H0)  # [N, H0, W0*C] bf16
        flat.append(up.reshape(N * H0 * W0, C))               # free reshape

    # --- fold eval-mode BatchNorm (+ conv1 bias) into scale/shift ---
    eps = 1e-5
    inv_std = 1.0 / jnp.sqrt(params["bn_var"] + eps)
    scale = params["bn_gamma"] * inv_std
    shift = (params["b1"] - params["bn_mean"]) * scale + params["bn_beta"]

    # --- pad head weights to lane-dense 1024/1024/128 (zero rows/cols) ---
    classes = params["w2"].shape[1]
    Cmid = sum(co for _, co in _STAGES)           # 960
    Kpad = sum(_STAGE_PAD)                        # 1024
    Npad = ((Cmid + 127) // 128) * 128            # 1024
    Cpad = ((classes + 127) // 128) * 128         # 128

    w1p = jnp.zeros((Kpad, Npad), jnp.float32)
    ro = po = 0
    for (_, rc), pc in zip(_STAGES, _STAGE_PAD):
        w1p = w1p.at[po:po + rc, :Cmid].set(params["w1"][ro:ro + rc])
        ro += rc
        po += pc
    scale_p = jnp.zeros((Npad,), jnp.float32).at[:Cmid].set(scale)
    shift_p = jnp.zeros((Npad,), jnp.float32).at[:Cmid].set(shift)
    w2p = jnp.zeros((Npad, Cpad), jnp.float32).at[:Cmid, :classes].set(params["w2"])
    b2p = jnp.zeros((Cpad,), jnp.float32).at[:classes].set(params["b2"])

    out2d = seg_head(flat[0], flat[1], flat[2], flat[3],
                     w1p.astype(jnp.bfloat16), scale_p, shift_p,
                     w2p.astype(jnp.bfloat16), b2p, classes)
    out = out2d.reshape(N, H0, W0, classes)
    return jnp.transpose(out, (0, 3, 1, 2))       # NCHW, like PyTorch


def _reference(x, params):
    """Plain-JAX f32 reference of the same pipeline (numerical verification)."""
    N, Cin, H, W = x.shape
    hp = jax.lax.Precision.HIGHEST
    feats = []
    for s, (patch, cout) in enumerate(_STAGES):
        h, w = H // patch, W // patch
        f = jnp.dot(patchify(x, patch), params[f"proj_w{s}"], precision=hp) + params[f"proj_b{s}"]
        feats.append(f.reshape(N, h * w, cout))
    H0, W0 = H // 4, W // 4
    ups = [feats[0]]
    for s in range(1, 4):
        patch, _ = _STAGES[s]
        h, w = H // patch, W // patch
        A = jnp.asarray(np.kron(interp_matrix_1d(H0, h), interp_matrix_1d(W0, w)))
        ups.append(jnp.einsum("pq,nqc->npc", A, feats[s], precision=hp))
    cat = jnp.concatenate(ups, axis=-1).reshape(N * H0 * W0, -1)
    eps = 1e-5
    scale = params["bn_gamma"] / jnp.sqrt(params["bn_var"] + eps)
    shift = (params["b1"] - params["bn_mean"]) * scale + params["bn_beta"]
    h1 = jnp.maximum(jnp.dot(cat, params["w1"], precision=hp) * scale + shift, 0.0)
    out = jnp.dot(h1, params["w2"], precision=hp) + params["b2"]
    classes = params["w2"].shape[1]
    return jnp.transpose(out.reshape(N, H0, W0, classes), (0, 3, 1, 2))


if __name__ == "__main__":
    key = jax.random.PRNGKey(0)
    kx, kp = jax.random.split(key)

    classes = 8
    x = jax.random.normal(kx, (2, 3, 64, 64), jnp.float32)   # NCHW input image
    params = make_params(kp, classes)

    out = jax.block_until_ready(seg_hrnet_forward(x, params))
    assert out.shape == (2, classes, 16, 16), out.shape

    ref = jax.block_until_ready(_reference(x, params))
    out_np, ref_np = np.asarray(out, np.float32), np.asarray(ref, np.float32)
    # bf16 MXU operands vs f32 reference -> moderate tolerance
    if not np.allclose(out_np, ref_np, rtol=5e-2, atol=5e-2):
        raise AssertionError(
            f"Pallas output mismatch vs JAX reference "
            f"(max abs err {np.max(np.abs(out_np - ref_np)):.4f})")

    print("KERNEL_OK")
</pallas_src>

<mosaic_0001>
module attributes {stable_mosaic.version = 11 : i64} {
  func.func @_matmul_bias_kernel(%arg0: i32, %arg1: memref<256x48xf32, #tpu.memory_space<vmem>>, %arg2: memref<48x128xbf16, #tpu.memory_space<vmem>>, %arg3: memref<1x128xf32, #tpu.memory_space<vmem>>, %arg4: memref<256x128xbf16, #tpu.memory_space<vmem>>) attributes {dimension_semantics = [#tpu.dimension_semantics<parallel>], iteration_bounds = array<i64: 2>, scalar_prefetch = 0 : i64, scratch_operands = 0 : i64, tpu.core_type = #tpu.core_type<tc>, window_params = [{transform_indices = @transform_0, window_bounds = array<i64: 256, 48>}, {pipeline_mode = #tpu.pipeline_mode<synchronous>, transform_indices = @transform_1, window_bounds = array<i64: 48, 128>}, {pipeline_mode = #tpu.pipeline_mode<synchronous>, transform_indices = @transform_2, window_bounds = array<i64: 1, 128>}, {transform_indices = @transform_3, window_bounds = array<i64: 256, 128>}]} {
    %c0 = arith.constant 0 : index
    %c0_0 = arith.constant 0 : index
    %0 = vector.load %arg1[%c0, %c0_0] : memref<256x48xf32, #tpu.memory_space<vmem>>, vector<256x48xf32>
    %1 = arith.truncf %0 : vector<256x48xf32> to vector<256x48xbf16>
    %c0_1 = arith.constant 0 : index
    %c0_2 = arith.constant 0 : index
    %2 = vector.load %arg2[%c0_1, %c0_2] : memref<48x128xbf16, #tpu.memory_space<vmem>>, vector<48x128xbf16>
    %cst = arith.constant dense<0.000000e+00> : vector<256x128xf32>
    %3 = tpu.matmul %1, %2, %cst {dimension_numbers = #tpu.dot_dimension_numbers<[1], [0], [0], [1], [0, 0, 1, 1], [], []>} : vector<256x48xbf16>, vector<48x128xbf16>, vector<256x128xf32> -> vector<256x128xf32>
    %c0_3 = arith.constant 0 : index
    %c0_4 = arith.constant 0 : index
    %4 = vector.load %arg3[%c0_3, %c0_4] : memref<1x128xf32, #tpu.memory_space<vmem>>, vector<1x128xf32>
    %5 = vector.broadcast %4 : vector<1x128xf32> to vector<256x128xf32>
    %6 = arith.addf %3, %5 : vector<256x128xf32>
    %7 = arith.truncf %6 : vector<256x128xf32> to vector<256x128xbf16>
    %c0_5 = arith.constant 0 : index
    %c0_6 = arith.constant 0 : index
    %8 = vector.load %arg4[%c0_5, %c0_6] : memref<256x128xbf16, #tpu.memory_space<vmem>>, vector<256x128xbf16>
    tpu.vector_store %arg4[%c0_5, %c0_6], %7 {strides = array<i32>} : memref<256x128xbf16, #tpu.memory_space<vmem>>, vector<256x128xbf16>,
    return
  }
  func.func @transform_0(%arg0: i32) -> (i32, i32) {
    %c0_i32 = arith.constant 0 : i32
    %c0_i32_0 = arith.constant 0 : i32
    return %arg0, %c0_i32 : i32, i32
  }
  func.func @transform_1(%arg0: i32) -> (i32, i32) {
    %c0_i32 = arith.constant 0 : i32
    %c0_i32_0 = arith.constant 0 : i32
    %c0_i32_1 = arith.constant 0 : i32
    return %c0_i32, %c0_i32_0 : i32, i32
  }
  func.func @transform_2(%arg0: i32) -> (i32, i32) {
    %c0_i32 = arith.constant 0 : i32
    %c0_i32_0 = arith.constant 0 : i32
    %c0_i32_1 = arith.constant 0 : i32
    return %c0_i32, %c0_i32_0 : i32, i32
  }
  func.func @transform_3(%arg0: i32) -> (i32, i32) {
    %c0_i32 = arith.constant 0 : i32
    %c0_i32_0 = arith.constant 0 : i32
    return %arg0, %c0_i32 : i32, i32
  }
}

</mosaic_0001>

<llo_original>
// kernel: tpu_custom_call.1
$region0: #{tpu_custom_call.1}
  #allocation0 [shape = 'u32[]', space=smem, size = 0x4, offset = 0x4, fixed_abs, tag = 'smem constant byte address 0x4 - core index']
  #allocation1 [shape = 'u32[144,128]{1,0:T(1,128)}', space=vmem, size = 0x12000, scoped, tag = 'internal scratch']
  %s0 = inlined_call_operand.vmem [shape: f32[512,48], index: 0, kind: input, shape index: {}]
  %s1 = inlined_call_operand.vmem [shape: bf16[48,128], index: 1, kind: input, shape index: {}]
  %s2 = inlined_call_operand.vmem [shape: f32[1,128], index: 2, kind: input, shape index: {}]
  %s3 = inlined_call_operand.hbm [shape: bf16[512,128], index: 3, kind: output, shape index: {}]
  %s4 = sld [smem:[#allocation0]]
  $region45: #{tpu_custom_call.1} parent=0
    _
  %s6 = ssub.s32 1, %s4
  %s7 = scalar_select 0, %s6, %s4
  $region1: #{tpu_custom_call.1} parent=0
    #allocation2 [shape = 'u8[131072]{0}', space=vmem, size = 0x20000, scoped, tag = 'output window, operand 0']
    #allocation3 [shape = 's32[2]{0}', space=sflag, size = 0x8, scoped, tag = 'scoped memory for tpu_custom_call.1']
    %8 = vsyncpa [#allocation3], 0
    %s9 = scalar_lea.sflag [#allocation3], 1
    %10 = vsyncpa %s9, 0
    loop: start=0, step=1, limit=4
    $region2: #{tpu_custom_call.1} parent=1 // loop_pre_header
      _
    $region3: #{tpu_custom_call.1} parent=1 // loop_header
      %s12 = sphi 0, %s16
      %p13 = scmp.ge.s32.totalorder %s12, 4
      %s22 = sphi 0, %s24
      %s25 = sphi 0, %s22
      %s26 = sphi 0, %s25
      %s42 = sphi 0, %s26
      %s46 = sphi 0, %s46
      %s48 = sphi 0, %s46
      %s49 = sphi 0, %s48
      %s63 = sphi 0, %s49
      %s67 = sphi 0, %s67
      %s69 = sphi 0, %s67
      %s70 = sphi 0, %s69
      %s84 = sphi 0, %s70
      %s90 = sphi 0, %s92
      %s93 = sphi 0, %s90
      %s94 = sphi 0, %s93
      %s110 = sphi 0, %s94
    $region4: #{tpu_custom_call.1} parent=1 // loop_header_branch
      %15 = sbr.rel (%p13) target = $region8
    $region5: #{tpu_custom_call.1} parent=1 // loop_body
      %s17 = ssub.s32 %s12, 1
      %s18 = ssub.s32 %s12, 2
      %s19 = sadd.s32 %s12, 1
      %s20 = ssub.s32 %s12, %s19
      %p21 = scmp.eq.s32.totalorder %s20, 0
      %s23 = sadd.s32 %s22, 1
      %s24 = scalar_select %p21, %s22, %s23
      %p27 = pneg %p21
      %p28 = scmp.eq.s32.totalorder %s12, 1
      %p29 = por %p27, %p28
      %p30 = scmp.ne.s32.totalorder %s22, %s25
      %p31 = scmp.eq.s32.totalorder %s12, 0
      %p32 = por %p30, %p31
      %p33 = scmp.ne.s32.totalorder %s22, %s25
      %p34 = scmp.eq.s32.totalorder %s17, 1
      %p35 = por %p33, %p34
      %p36 = scmp.ne.s32.totalorder %s25, %s26
      %p37 = scmp.eq.s32.totalorder %s17, 0
      %p38 = por %p36, %p37
      %p39 = scmp.ne.s32.totalorder %s25, %s26
      %p40 = scmp.eq.s32.totalorder %s18, 1
      %p41 = por %p39, %p40
      %p43 = scmp.ne.s32.totalorder %s26, %s42
      %p44 = scmp.eq.s32.totalorder %s18, 0
      %p45 = por %p43, %p44
      %s47 = sadd.s32 %s46, 1
      %p50 = scmp.eq.s32.totalorder %s12, 1
      %p51 = scmp.ne.s32.totalorder %s46, %s48
      %p52 = scmp.eq.s32.totalorder %s12, 0
      %p53 = por %p51, %p52
      %p54 = scmp.ne.s32.totalorder %s46, %s48
      %p55 = scmp.eq.s32.totalorder %s17, 1
      %p56 = por %p54, %p55
      %p57 = scmp.ne.s32.totalorder %s48, %s49
      %p58 = scmp.eq.s32.totalorder %s17, 0
      %p59 = por %p57, %p58
      %p60 = scmp.ne.s32.totalorder %s48, %s49
      %p61 = scmp.eq.s32.totalorder %s18, 1
      %p62 = por %p60, %p61
      %p64 = scmp.ne.s32.totalorder %s49, %s63
      %p65 = scmp.eq.s32.totalorder %s18, 0
      %p66 = por %p64, %p65
      %s68 = sadd.s32 %s67, 1
      %p71 = scmp.eq.s32.totalorder %s12, 1
      %p72 = scmp.ne.s32.totalorder %s67, %s69
      %p73 = scmp.eq.s32.totalorder %s12, 0
      %p74 = por %p72, %p73
      %p75 = scmp.ne.s32.totalorder %s67, %s69
      %p76 = scmp.eq.s32.totalorder %s17, 1
      %p77 = por %p75, %p76
      %p78 = scmp.ne.s32.totalorder %s69, %s70
      %p79 = scmp.eq.s32.totalorder %s17, 0
      %p80 = por %p78, %p79
      %p81 = scmp.ne.s32.totalorder %s69, %s70
      %p82 = scmp.eq.s32.totalorder %s18, 1
      %p83 = por %p81, %p82
      %p85 = scmp.ne.s32.totalorder %s70, %s84
      %p86 = scmp.eq.s32.totalorder %s18, 0
      %p87 = por %p85, %p86
      %s88 = ssub.s32 %s12, %s19
      %p89 = scmp.eq.s32.totalorder %s88, 0
      %s91 = sadd.s32 %s90, 1
      %s92 = scalar_select %p89, %s90, %s91
      %p95 = pneg %p89
      %p96 = scmp.eq.s32.totalorder %s12, 1
      %p97 = por %p95, %p96
      %p98 = scmp.ne.s32.totalorder %s90, %s93
      %p99 = scmp.eq.s32.totalorder %s12, 0
      %p100 = por %p98, %p99
      %p101 = scmp.ne.s32.totalorder %s90, %s93
      %p102 = scmp.eq.s32.totalorder %s17, 1
      %p103 = por %p101, %p102
      %p104 = scmp.ne.s32.totalorder %s93, %s94
      %p105 = scmp.eq.s32.totalorder %s17, 0
      %p106 = por %p104, %p105
      %p107 = scmp.ne.s32.totalorder %s93, %s94
      %p108 = scmp.eq.s32.totalorder %s18, 1
      %p109 = por %p107, %p108
      %p111 = scmp.ne.s32.totalorder %s94, %s110
      %p112 = scmp.eq.s32.totalorder %s18, 0
      %p113 = por %p111, %p112
      %p114 = scmp.le.s32.totalorder 1, %s12
      %p115 = scmp.lt.s32.totalorder %s12, 3
      %p116 = pnand %p114, %p115
      %p117 = pneg %p116
      // Predicated region
      $region9: #{tpu_custom_call.1} parent=5 // pred_check
        _
      $region10: #{tpu_custom_call.1} parent=5 // pred_check_branch
        %119 = sbr.rel (%p116) target = $region12
      $region11: #{tpu_custom_call.1} parent=5 // pred_region
        %s120 = ssub.s32 %s12, 1
        // Predicated region
        $region13: #{tpu_custom_call.1} parent=11 // pred_check
          %p121 = pneg %p59
        $region14: #{tpu_custom_call.1} parent=11 // pred_check_branch
          %123 = sbr.rel (%p121) target = $region16
        $region15: #{tpu_custom_call.1} parent=11 // pred_region
          _
        $region16: #{tpu_custom_call.1} parent=11 // pred_fallthru
          _
        // Predicated region
        $region17: #{tpu_custom_call.1} parent=11 // pred_check
          %p124 = pneg %p80
        $region18: #{tpu_custom_call.1} parent=11 // pred_check_branch
          %126 = sbr.rel (%p124) target = $region20
        $region19: #{tpu_custom_call.1} parent=11 // pred_region
          _
        $region20: #{tpu_custom_call.1} parent=11 // pred_fallthru
          _
      $region12: #{tpu_custom_call.1} parent=5 // pred_fallthru
        _
      %p127 = scmp.lt.s32.totalorder %s12, 2
      // Predicated region
      $region21: #{tpu_custom_call.1} parent=5 // pred_check
        %p128 = pneg %p127
      $region22: #{tpu_custom_call.1} parent=5 // pred_check_branch
        %130 = sbr.rel (%p128) target = $region24
      $region23: #{tpu_custom_call.1} parent=5 // pred_region
        // Predicated region
        $region25: #{tpu_custom_call.1} parent=23 // pred_check
          %p131 = pneg %p32
        $region26: #{tpu_custom_call.1} parent=23 // pred_check_branch
          %133 = sbr.rel (%p131) target = $region28
        $region27: #{tpu_custom_call.1} parent=23 // pred_region
          %s134 = smul.u32 32, %s12
          %p135 = scmp.lt.s32.totalorder %s134, 63
          %s136 = scalar_select %p135, %s134, 63
          %s137 = smul.addr %s136, 8
          %s138 = scalar_lea.vmem %s0, %s137
          %s139 = smul.u32 32, %s12
        $region28: #{tpu_custom_call.1} parent=23 // pred_fallthru
          _
      $region24: #{tpu_custom_call.1} parent=5 // pred_fallthru
        _
      %p140 = scmp.le.s32.totalorder 1, %s12
      %p141 = scmp.lt.s32.totalorder %s12, 3
      %p142 = pnand %p140, %p141
      %p143 = pneg %p142
      // Predicated region
      $region29: #{tpu_custom_call.1} parent=5 // pred_check
        _
      $region30: #{tpu_custom_call.1} parent=5 // pred_check_branch
        %145 = sbr.rel (%p142) target = $region32
      $region31: #{tpu_custom_call.1} parent=5 // pred_region
        %s146 = ssub.s32 %s12, 1
        %s147 = smul.u32 32, %s17
        %p148 = scmp.lt.s32.totalorder %s147, 63
        %s149 = scalar_select %p148, %s147, 63
        %s150 = smul.addr %s149, 8
        %s151 = scalar_lea.vmem %s0, %s150
        %p152 = pneg %p38
        %p153 = pneg %p35
        %p154 = pneg %p59
        %p155 = pneg %p56
        %p156 = pneg %p80
        %p157 = pneg %p77
        %p158 = pneg %p106
        %p159 = pneg %p103
        %s160 = sand.u32 %s93, 1
        %s161 = scalar_lea.sflag [#allocation3], %s160
        %s162 = sand.u32 %s93, 1
        %s163 = smul.addr %s162, 128
        %s164 = scalar_lea.vmem [#allocation2], %s163
        %s165 = smul.u32 32, %s17
        %p166 = scmp.lt.s32.totalorder %s165, 63
        %s167 = scalar_select %p166, %s165, 63
        %s168 = smul.addr %s167, 8
        %s169 = scalar_lea.vmem %s0, %s168
        %s170 = smul.u32 32, %s17
        %s171 = smul.u32 32, %s17
        %v173 = vld [vmem:[%s169] sm:$0xff]
        %v174 = vld [vmem:[%s169 + $0x8] sm:$0xff]
        %v175 = vld [vmem:[%s169 + $0x10] sm:$0xff]
        %v176 = vld [vmem:[%s169 + $0x18] sm:$0xff]
        %v177 = vld [vmem:[%s169 + $0x20] sm:$0xff]
        %v178 = vld [vmem:[%s169 + $0x28] sm:$0xff]
        %v179 = vld [vmem:[%s169 + $0x30] sm:$0xff]
        %v180 = vld [vmem:[%s169 + $0x38] sm:$0xff]
        %v181 = vld [vmem:[%s169 + $0x40] sm:$0xff]
        %v182 = vld [vmem:[%s169 + $0x48] sm:$0xff]
        %v183 = vld [vmem:[%s169 + $0x50] sm:$0xff]
        %v184 = vld [vmem:[%s169 + $0x58] sm:$0xff]
        %v185 = vld [vmem:[%s169 + $0x60] sm:$0xff]
        %v186 = vld [vmem:[%s169 + $0x68] sm:$0xff]
        %v187 = vld [vmem:[%s169 + $0x70] sm:$0xff]
        %v188 = vld [vmem:[%s169 + $0x78] sm:$0xff]
        %v189 = vld [vmem:[%s169 + $0x80] sm:$0xff]
        %v190 = vld [vmem:[%s169 + $0x88] sm:$0xff]
        %v191 = vld [vmem:[%s169 + $0x90] sm:$0xff]
        %v192 = vld [vmem:[%s169 + $0x98] sm:$0xff]
        %v193 = vld [vmem:[%s169 + $0xa0] sm:$0xff]
        %v194 = vld [vmem:[%s169 + $0xa8] sm:$0xff]
        %v195 = vld [vmem:[%s169 + $0xb0] sm:$0xff]
        %v196 = vld [vmem:[%s169 + $0xb8] sm:$0xff]
        %v197 = vld [vmem:[%s169 + $0xc0] sm:$0xff]
        %v198 = vld [vmem:[%s169 + $0xc8] sm:$0xff]
        %v199 = vld [vmem:[%s169 + $0xd0] sm:$0xff]
        %v200 = vld [vmem:[%s169 + $0xd8] sm:$0xff]
        %v201 = vld [vmem:[%s169 + $0xe0] sm:$0xff]
        %v202 = vld [vmem:[%s169 + $0xe8] sm:$0xff]
        %v203 = vld [vmem:[%s169 + $0xf0] sm:$0xff]
        %v204 = vld [vmem:[%s169 + $0xf8] sm:$0xff]
        %v205 = vpack.c.bf16 %v174, %v173
        %v206 = vpack.c.bf16 %v176, %v175
        %v207 = vpack.c.bf16 %v178, %v177
        %v208 = vpack.c.bf16 %v180, %v179
        %v209 = vpack.c.bf16 %v182, %v181
        %v210 = vpack.c.bf16 %v184, %v183
        %v211 = vpack.c.bf16 %v186, %v185
        %v212 = vpack.c.bf16 %v188, %v187
        %v213 = vpack.c.bf16 %v190, %v189
        %v214 = vpack.c.bf16 %v192, %v191
        %v215 = vpack.c.bf16 %v194, %v193
        %v216 = vpack.c.bf16 %v196, %v195
        %v217 = vpack.c.bf16 %v198, %v197
        %v218 = vpack.c.bf16 %v200, %v199
        %v219 = vpack.c.bf16 %v202, %v201
        %v220 = vpack.c.bf16 %v204, %v203
        %v221 = vld [vmem:[%s1] sm:$0xf]
        %v222 = vld [vmem:[%s1 + $0x4] sm:$0xf]
        %v223 = vld [vmem:[%s1 + $0x8] sm:$0xf]
        %v224 = vld [vmem:[%s1 + $0xc] sm:$0xf]
        %v225 = vld [vmem:[%s1 + $0x10] sm:$0xf]
        %v226 = vld [vmem:[%s1 + $0x14] sm:$0xf]
        %v227 = vld [vmem:[%s2] sm:$0x1]
        %v229 = vlaneseq
        %v230 = vshrl.u32 %v229, 7
        %v231 = vsub.s32 0, %v230
        %v232 = vrot.slane %v227, %v231
        %v240 = vunpack.c.l.b16 %v221
        %v241 = vunpack.c.l.b16 %v222
        %v242 = vunpack.c.l.b16 %v223
        %v243 = vunpack.c.l.b16 %v224
        %v244 = vunpack.c.l.b16 %v225
        %v245 = vunpack.c.l.b16 %v226
        %v246 = vpack.c.b16 %v241, %v240
        %v247 = vpack.c.b16 %v243, %v242
        %v248 = vpack.c.b16 %v245, %v244
        %vm252 = vcmask 392192
        %v254 = vsel %vm252, %v205, 0
        %v257 = vsel %vm252, %v206, 0
        %v260 = vsel %vm252, %v207, 0
        %v263 = vsel %vm252, %v208, 0
        %v266 = vsel %vm252, %v209, 0
        %v269 = vsel %vm252, %v210, 0
        %v272 = vsel %vm252, %v211, 0
        %v275 = vsel %vm252, %v212, 0
        %v278 = vsel %vm252, %v213, 0
        %v281 = vsel %vm252, %v214, 0
        %v284 = vsel %vm252, %v215, 0
        %v287 = vsel %vm252, %v216, 0
        %v290 = vsel %vm252, %v217, 0
        %v293 = vsel %vm252, %v218, 0
        %v296 = vsel %vm252, %v219, 0
        %v299 = vsel %vm252, %v220, 0
        %301 = vmatprep.subr.bf16.mxu0 0
        %302 = vmatpush1.bf16.msra.mxu0 %v246
        %303 = vmatprep.subr.bf16.mxu0 0
        %304 = vmatpush1.bf16.msra.mxu0 %v247
        %305 = vmatprep.subr.bf16.mxu0 0
        %306 = vmatpush1.bf16.msra.mxu0 %v248
        %307 = vmatprep.subr.bf16.mxu0 0
        %308 = vmatpush1.bf16.msra.mxu0 0
        %309 = vmatprep.subr.bf16.mxu0 0
        %310 = vmatpush1.bf16.msra.mxu0 0
        %311 = vmatprep.subr.bf16.mxu0 0
        %312 = vmatpush1.bf16.msra.mxu0 0
        %313 = vmatprep.subr.bf16.mxu0 0
        %314 = vmatpush1.bf16.msra.mxu0 0
        %315 = vmatprep.subr.bf16.mxu0 0
        %316 = vmatpush1.bf16.msra.mxu0 0
        %317 = vmatprep.subr.bf16.mxu0 0
        %318 = vmatpush1.bf16.msra.mxu0 0
        %319 = vmatprep.subr.bf16.mxu0 0
        %320 = vmatpush1.bf16.msra.mxu0 0
        %321 = vmatprep.subr.bf16.mxu0 0
        %322 = vmatpush1.bf16.msra.mxu0 0
        %323 = vmatprep.subr.bf16.mxu0 0
        %324 = vmatpush1.bf16.msra.mxu0 0
        %325 = vmatprep.subr.bf16.mxu0 0
        %326 = vmatpush1.bf16.msra.mxu0 0
        %327 = vmatprep.subr.bf16.mxu0 0
        %328 = vmatpush1.bf16.msra.mxu0 0
        %329 = vmatprep.subr.bf16.mxu0 0
        %330 = vmatpush1.bf16.msra.mxu0 0
        %331 = vmatprep.subr.bf16.mxu0 0
        %332 = vmatpush1.bf16.msra.mxu0 0
        %333 = vmatprep.mubr.bf16.mxu0 0
        %334 = vmatmul.mubr.bf16.gmra.mrb[0].mxu0 %v254
        %v335 = vpop.f32.mrb[0].mxu0
        %v336 = vadd.f32 %v232, %v335
        %v337 = vpop.f32.mrb[0].mxu0
        %v338 = vpop.f32.mrb[0].mxu0
        %v339 = vadd.f32 %v232, %v338
        %v340 = vpop.f32.mrb[0].mxu0
        %341 = vmatprep.mubr.bf16.mxu0 0
        %342 = vmatmul.mubr.bf16.gmra.mrb[0].mxu0 %v257
        %v343 = vpop.f32.mrb[0].mxu0
        %v344 = vadd.f32 %v232, %v343
        %v345 = vpop.f32.mrb[0].mxu0
        %v346 = vpop.f32.mrb[0].mxu0
        %v347 = vadd.f32 %v232, %v346
        %v348 = vpop.f32.mrb[0].mxu0
        %349 = vmatprep.mubr.bf16.mxu0 0
        %350 = vmatmul.mubr.bf16.gmra.mrb[0].mxu0 %v260
        %v351 = vpop.f32.mrb[0].mxu0
        %v352 = vadd.f32 %v232, %v351
        %v353 = vpop.f32.mrb[0].mxu0
        %v354 = vpop.f32.mrb[0].mxu0
        %v355 = vadd.f32 %v232, %v354
        %v356 = vpop.f32.mrb[0].mxu0
        %357 = vmatprep.mubr.bf16.mxu0 0
        %358 = vmatmul.mubr.bf16.gmra.mrb[0].mxu0 %v263
        %v359 = vpop.f32.mrb[0].mxu0
        %v360 = vadd.f32 %v232, %v359
        %v361 = vpop.f32.mrb[0].mxu0
        %v362 = vpop.f32.mrb[0].mxu0
        %v363 = vadd.f32 %v232, %v362
        %v364 = vpop.f32.mrb[0].mxu0
        %365 = vmatprep.mubr.bf16.mxu0 0
        %366 = vmatmul.mubr.bf16.gmra.mrb[0].mxu0 %v266
        %v367 = vpop.f32.mrb[0].mxu0
        %v368 = vadd.f32 %v232, %v367
        %v369 = vpop.f32.mrb[0].mxu0
        %v370 = vpop.f32.mrb[0].mxu0
        %v371 = vadd.f32 %v232, %v370
        %v372 = vpop.f32.mrb[0].mxu0
        %373 = vmatprep.mubr.bf16.mxu0 0
        %374 = vmatmul.mubr.bf16.gmra.mrb[0].mxu0 %v269
        %v375 = vpop.f32.mrb[0].mxu0
        %v376 = vadd.f32 %v232, %v375
        %v377 = vpop.f32.mrb[0].mxu0
        %v378 = vpop.f32.mrb[0].mxu0
        %v379 = vadd.f32 %v232, %v378
        %v380 = vpop.f32.mrb[0].mxu0
        %381 = vmatprep.mubr.bf16.mxu0 0
        %382 = vmatmul.mubr.bf16.gmra.mrb[0].mxu0 %v272
        %v383 = vpop.f32.mrb[0].mxu0
        %v384 = vadd.f32 %v232, %v383
        %v385 = vpop.f32.mrb[0].mxu0
        %v386 = vpop.f32.mrb[0].mxu0
        %v387 = vadd.f32 %v232, %v386
        %v388 = vpop.f32.mrb[0].mxu0
        %389 = vmatprep.mubr.bf16.mxu0 0
        %390 = vmatmul.mubr.bf16.gmra.mrb[0].mxu0 %v275
        %v391 = vpop.f32.mrb[0].mxu0
        %v392 = vadd.f32 %v232, %v391
        %v393 = vpop.f32.mrb[0].mxu0
        %v394 = vpop.f32.mrb[0].mxu0
        %v395 = vadd.f32 %v232, %v394
        %v396 = vpop.f32.mrb[0].mxu0
        %397 = vmatprep.mubr.bf16.mxu0 0
        %398 = vmatmul.mubr.bf16.gmra.mrb[0].mxu0 %v278
        %v399 = vpop.f32.mrb[0].mxu0
        %v400 = vadd.f32 %v232, %v399
        %v401 = vpop.f32.mrb[0].mxu0
        %v402 = vpop.f32.mrb[0].mxu0
        %v403 = vadd.f32 %v232, %v402
        %v404 = vpop.f32.mrb[0].mxu0
        %405 = vmatprep.mubr.bf16.mxu0 0
        %406 = vmatmul.mubr.bf16.gmra.mrb[0].mxu0 %v281
        %v407 = vpop.f32.mrb[0].mxu0
        %v408 = vadd.f32 %v232, %v407
        %v409 = vpop.f32.mrb[0].mxu0
        %v410 = vpop.f32.mrb[0].mxu0
        %v411 = vadd.f32 %v232, %v410
        %v412 = vpop.f32.mrb[0].mxu0
        %413 = vmatprep.mubr.bf16.mxu0 0
        %414 = vmatmul.mubr.bf16.gmra.mrb[0].mxu0 %v284
        %v415 = vpop.f32.mrb[0].mxu0
        %v416 = vadd.f32 %v232, %v415
        %v417 = vpop.f32.mrb[0].mxu0
        %v418 = vpop.f32.mrb[0].mxu0
        %v419 = vadd.f32 %v232, %v418
        %v420 = vpop.f32.mrb[0].mxu0
        %421 = vmatprep.mubr.bf16.mxu0 0
        %422 = vmatmul.mubr.bf16.gmra.mrb[0].mxu0 %v287
        %v423 = vpop.f32.mrb[0].mxu0
        %v424 = vadd.f32 %v232, %v423
        %v425 = vpop.f32.mrb[0].mxu0
        %v426 = vpop.f32.mrb[0].mxu0
        %v427 = vadd.f32 %v232, %v426
        %v428 = vpop.f32.mrb[0].mxu0
        %429 = vmatprep.mubr.bf16.mxu0 0
        %430 = vmatmul.mubr.bf16.gmra.mrb[0].mxu0 %v290
        %v431 = vpop.f32.mrb[0].mxu0
        %v432 = vadd.f32 %v232, %v431
        %v433 = vpop.f32.mrb[0].mxu0
        %v434 = vpop.f32.mrb[0].mxu0
        %v435 = vadd.f32 %v232, %v434
        %v436 = vpop.f32.mrb[0].mxu0
        %437 = vmatprep.mubr.bf16.mxu0 0
        %438 = vmatmul.mubr.bf16.gmra.mrb[0].mxu0 %v293
        %v439 = vpop.f32.mrb[0].mxu0
        %v440 = vadd.f32 %v232, %v439
        %v441 = vpop.f32.mrb[0].mxu0
        %v442 = vpop.f32.mrb[0].mxu0
        %v443 = vadd.f32 %v232, %v442
        %v444 = vpop.f32.mrb[0].mxu0
        %445 = vmatprep.mubr.bf16.mxu0 0
        %446 = vmatmul.mubr.bf16.gmra.mrb[0].mxu0 %v296
        %v447 = vpop.f32.mrb[0].mxu0
        %v448 = vadd.f32 %v232, %v447
        %v449 = vpop.f32.mrb[0].mxu0
        %v450 = vpop.f32.mrb[0].mxu0
        %v451 = vadd.f32 %v232, %v450
        %v452 = vpop.f32.mrb[0].mxu0
        %453 = vmatprep.mubr.bf16.mxu0 0
        %454 = vmatmul.mubr.bf16.gmra.mrb[0].mxu0 %v299
        %v455 = vpop.f32.mrb[0].mxu0
        %v456 = vadd.f32 %v232, %v455
        %v457 = vpop.f32.mrb[0].mxu0
        %v458 = vpop.f32.mrb[0].mxu0
        %v459 = vadd.f32 %v232, %v458
        %v460 = vpop.f32.mrb[0].mxu0
        %461 = vdwg.mxu0
        %v462 = vpack.c.bf16 %v339, %v336
        %v463 = vpack.c.bf16 %v347, %v344
        %v464 = vpack.c.bf16 %v355, %v352
        %v465 = vpack.c.bf16 %v363, %v360
        %v466 = vpack.c.bf16 %v371, %v368
        %v467 = vpack.c.bf16 %v379, %v376
        %v468 = vpack.c.bf16 %v387, %v384
        %v469 = vpack.c.bf16 %v395, %v392
        %v470 = vpack.c.bf16 %v403, %v400
        %v471 = vpack.c.bf16 %v411, %v408
        %v472 = vpack.c.bf16 %v419, %v416
        %v473 = vpack.c.bf16 %v427, %v424
        %v474 = vpack.c.bf16 %v435, %v432
        %v475 = vpack.c.bf16 %v443, %v440
        %v476 = vpack.c.bf16 %v451, %v448
        %v477 = vpack.c.bf16 %v459, %v456
        %v494 = vunpack.c.l.b16 %v462
        %v495 = vunpack.c.h.b16 %v462
        %v496 = vunpack.c.l.b16 %v463
        %v497 = vunpack.c.h.b16 %v463
        %v498 = vunpack.c.l.b16 %v464
        %v499 = vunpack.c.h.b16 %v464
        %v500 = vunpack.c.l.b16 %v465
        %v501 = vunpack.c.h.b16 %v465
        %v502 = vunpack.c.l.b16 %v466
        %v503 = vunpack.c.h.b16 %v466
        %v504 = vunpack.c.l.b16 %v467
        %v505 = vunpack.c.h.b16 %v467
        %v506 = vunpack.c.l.b16 %v468
        %v507 = vunpack.c.h.b16 %v468
        %v508 = vunpack.c.l.b16 %v469
        %v509 = vunpack.c.h.b16 %v469
        %v510 = vunpack.c.l.b16 %v470
        %v511 = vunpack.c.h.b16 %v470
        %v512 = vunpack.c.l.b16 %v471
        %v513 = vunpack.c.h.b16 %v471
        %v514 = vunpack.c.l.b16 %v472
        %v515 = vunpack.c.h.b16 %v472
        %v516 = vunpack.c.l.b16 %v473
        %v517 = vunpack.c.h.b16 %v473
        %v518 = vunpack.c.l.b16 %v474
        %v519 = vunpack.c.h.b16 %v474
        %v520 = vunpack.c.l.b16 %v475
        %v521 = vunpack.c.h.b16 %v475
        %v522 = vunpack.c.l.b16 %v476
        %v523 = vunpack.c.h.b16 %v476
        %v524 = vunpack.c.l.b16 %v477
        %v525 = vunpack.c.h.b16 %v477
        %v526 = vpack.c.b16 %v494, %v494
        %v527 = vpack.c.b16 %v495, %v495
        %v528 = vpack.c.b16 %v496, %v496
        %v529 = vpack.c.b16 %v497, %v497
        %v530 = vpack.c.b16 %v498, %v498
        %v531 = vpack.c.b16 %v499, %v499
        %v532 = vpack.c.b16 %v500, %v500
        %v533 = vpack.c.b16 %v501, %v501
        %v534 = vpack.c.b16 %v502, %v502
        %v535 = vpack.c.b16 %v503, %v503
        %v536 = vpack.c.b16 %v504, %v504
        %v537 = vpack.c.b16 %v505, %v505
        %v538 = vpack.c.b16 %v506, %v506
        %v539 = vpack.c.b16 %v507, %v507
        %v540 = vpack.c.b16 %v508, %v508
        %v541 = vpack.c.b16 %v509, %v509
        %v542 = vpack.c.b16 %v510, %v510
        %v543 = vpack.c.b16 %v511, %v511
        %v544 = vpack.c.b16 %v512, %v512
        %v545 = vpack.c.b16 %v513, %v513
        %v546 = vpack.c.b16 %v514, %v514
        %v547 = vpack.c.b16 %v515, %v515
        %v548 = vpack.c.b16 %v516, %v516
        %v549 = vpack.c.b16 %v517, %v517
        %v550 = vpack.c.b16 %v518, %v518
        %v551 = vpack.c.b16 %v519, %v519
        %v552 = vpack.c.b16 %v520, %v520
        %v553 = vpack.c.b16 %v521, %v521
        %v554 = vpack.c.b16 %v522, %v522
        %v555 = vpack.c.b16 %v523, %v523
        %v556 = vpack.c.b16 %v524, %v524
        %v557 = vpack.c.b16 %v525, %v525
        %590 = vst [vmem:[%s164] sm:$0xf] %v526
        %591 = vst [vmem:[%s164 + $0x4] sm:$0xf] %v527
        %592 = vst [vmem:[%s164 + $0x8] sm:$0xf] %v528
        %593 = vst [vmem:[%s164 + $0xc] sm:$0xf] %v529
        %594 = vst [vmem:[%s164 + $0x10] sm:$0xf] %v530
        %595 = vst [vmem:[%s164 + $0x14] sm:$0xf] %v531
        %596 = vst [vmem:[%s164 + $0x18] sm:$0xf] %v532
        %597 = vst [vmem:[%s164 + $0x1c] sm:$0xf] %v533
        %598 = vst [vmem:[%s164 + $0x20] sm:$0xf] %v534
        %599 = vst [vmem:[%s164 + $0x24] sm:$0xf] %v535
        %600 = vst [vmem:[%s164 + $0x28] sm:$0xf] %v536
        %601 = vst [vmem:[%s164 + $0x2c] sm:$0xf] %v537
        %602 = vst [vmem:[%s164 + $0x30] sm:$0xf] %v538
        %603 = vst [vmem:[%s164 + $0x34] sm:$0xf] %v539
        %604 = vst [vmem:[%s164 + $0x38] sm:$0xf] %v540
        %605 = vst [vmem:[%s164 + $0x3c] sm:$0xf] %v541
        %606 = vst [vmem:[%s164 + $0x40] sm:$0xf] %v542
        %607 = vst [vmem:[%s164 + $0x44] sm:$0xf] %v543
        %608 = vst [vmem:[%s164 + $0x48] sm:$0xf] %v544
        %609 = vst [vmem:[%s164 + $0x4c] sm:$0xf] %v545
        %610 = vst [vmem:[%s164 + $0x50] sm:$0xf] %v546
        %611 = vst [vmem:[%s164 + $0x54] sm:$0xf] %v547
        %612 = vst [vmem:[%s164 + $0x58] sm:$0xf] %v548
        %613 = vst [vmem:[%s164 + $0x5c] sm:$0xf] %v549
        %614 = vst [vmem:[%s164 + $0x60] sm:$0xf] %v550
        %615 = vst [vmem:[%s164 + $0x64] sm:$0xf] %v551
        %616 = vst [vmem:[%s164 + $0x68] sm:$0xf] %v552
        %617 = vst [vmem:[%s164 + $0x6c] sm:$0xf] %v553
        %618 = vst [vmem:[%s164 + $0x70] sm:$0xf] %v554
        %619 = vst [vmem:[%s164 + $0x74] sm:$0xf] %v555
        %620 = vst [vmem:[%s164 + $0x78] sm:$0xf] %v556
        %621 = vst [vmem:[%s164 + $0x7c] sm:$0xf] %v557
        %s622 = sand.u32 %s93, 1
        %s623 = scalar_lea.sflag [#allocation3], %s622
        %s624 = sand.u32 %s93, 1
        %s625 = smul.addr %s624, 128
        %s626 = scalar_lea.vmem [#allocation2], %s625
        // Predicated region
        $region33: #{tpu_custom_call.1} parent=31 // pred_check
          %p627 = pneg %p103
        $region34: #{tpu_custom_call.1} parent=31 // pred_check_branch
          %629 = sbr.rel (%p627) target = $region36
        $region35: #{tpu_custom_call.1} parent=31 // pred_region
          %s630 = smul.u32 32, %s17
          %s632 = ssub.s32 2048, 2048
          %633 = vsyncadd %s623, %s632
          %s634 = smul.addr %s630, 64
          %s635 = scalar_lea.hbm %s3, %s634
          %s636 = sshll.u32 %s626, 4
          %s637 = int_to_ptr.vmem [resolvable:$true] %s636
          %642 = dma.vmem_to_hbm [thread:$0]  %s637, 2048, %s635, %s623, 64, 64, 4
        $region36: #{tpu_custom_call.1} parent=31 // pred_fallthru
          _
      $region32: #{tpu_custom_call.1} parent=5 // pred_fallthru
        _
      %p643 = scmp.le.s32.totalorder 2, %s12
      // Predicated region
      $region37: #{tpu_custom_call.1} parent=5 // pred_check
        %p644 = pneg %p643
      $region38: #{tpu_custom_call.1} parent=5 // pred_check_branch
        %646 = sbr.rel (%p644) target = $region40
      $region39: #{tpu_custom_call.1} parent=5 // pred_region
        %s647 = ssub.s32 %s12, 2
        // Predicated region
        $region41: #{tpu_custom_call.1} parent=39 // pred_check
          %p648 = pneg %p109
        $region42: #{tpu_custom_call.1} parent=39 // pred_check_branch
          %650 = sbr.rel (%p648) target = $region44
        $region43: #{tpu_custom_call.1} parent=39 // pred_region
          %s651 = sand.u32 %s94, 1
          %s652 = scalar_lea.sflag [#allocation3], %s651
          %s653 = sand.u32 %s94, 1
          %s654 = smul.addr %s653, 128
          %s655 = scalar_lea.vmem [#allocation2], %s654
          %656 = dma.done %s652, 2048
        $region44: #{tpu_custom_call.1} parent=39 // pred_fallthru
          _
      $region40: #{tpu_custom_call.1} parent=5 // pred_fallthru
        _
    $region6: #{tpu_custom_call.1} parent=1 // loop_footer
      %s16 = sadd.s32 1, %s12
    $region7: #{tpu_custom_call.1} parent=1 // loop_footer_branch
      %11 = sbr.rel target = $region3
    $region8: #{tpu_custom_call.1} parent=1 // loop_exit
      _
    %657 = vsyncpa [#allocation3], 1
    %s658 = scalar_lea.sflag [#allocation3], 1
    %659 = vsyncpa %s658, 1

</llo_original>
